<compile_context>
chip_gen: v5e
topology: v5e:2x2
jax: 0.10.0
libtpu: 0.0.40
codegen_flags: <defaults>
</compile_context>

<pallas_src>
import functools

import jax
import jax.numpy as jnp
from jax.experimental import pallas as pl
from jax.experimental.pallas import tpu as pltpu

DEFAULT_EPS = 1e-6  # HF Mixtral uses config.rms_norm_eps (commonly 1e-5 or 1e-6).

_MIB = 1024 * 1024


def _round_up(a, b):
    return -(-a // b) * b


def _cdiv(a, b):
    return -(-a // b)


def _vmem_capacity_bytes():
    """Generation-aware VMEM capacity (64 MiB v7x, 128 MiB v5e/v6e)."""
    try:
        cap = int(pltpu.get_tpu_info().vmem_capacity_bytes)
        if cap > 0:
            return cap
    except Exception:
        pass
    return 64 * _MIB  # conservative fallback (v7x-sized VMEM)


def _choose_tm(rows, hidden, in_itemsize, out_itemsize, vmem_budget):
    """Pick the row-tile size: large, sublane-aligned, VMEM- and grid-aware."""
    # Sublane packing of the narrowest dtype in play (8 rows f32, 16 bf16, 32 i8).
    pack = max(8, 32 // min(in_itemsize, out_itemsize))
    # Live VMEM per tile row:
    #   double-buffered input block          : 2 * H * in_itemsize
    #   double-buffered output block         : 2 * H * out_itemsize
    #   in-kernel f32 temporaries (x32, normed): ~2 * H * 4
    bytes_per_row = hidden * (2 * in_itemsize + 2 * out_itemsize + 8)
    max_tm = max(pack, vmem_budget // bytes_per_row)
    # Memory-bound sweet spot (~85% of HBM roofline measured on v6e).
    target = 1024 if max(in_itemsize, out_itemsize) < 4 else 512
    tm = min(target, max_tm)
    # Keep >= ~8 grid steps (when rows allow it) so both v7x TensorCores get
    # work under dimension_semantics=("parallel",) and the DMA double-buffer
    # has enough steps to hide its prologue/epilogue.
    tm = min(tm, max(pack, _round_up(_cdiv(rows, 8), pack)))
    return max(pack, (tm // pack) * pack)


def _rmsnorm_kernel(x_ref, w_ref, o_ref, *, eps):
    # x_ref: (TM, H) tile of rows, w_ref: (1, H) weight, o_ref: (TM, H).
    #
    # NOTE: the grid is cdiv(rows, tm) with NO padding.  The last block may
    # cover rows past the end of the array; those VMEM rows hold unspecified
    # data (possibly NaN/Inf).  Every op in this body is strictly row-wise,
    # so garbage rows cannot contaminate valid rows, and Pallas masks their
    # stores.  Do NOT introduce any cross-row coupling here.
    x32 = x_ref[...].astype(jnp.float32)
    var = jnp.mean(x32 * x32, axis=-1, keepdims=True)
    # Match HF Mixtral: cast back to the input dtype BEFORE the weight mul;
    # the weight mul then follows normal dtype promotion (o_ref dtype).
    normed = (x32 * jax.lax.rsqrt(var + eps)).astype(x_ref.dtype)
    o_ref[...] = (w_ref[...] * normed).astype(o_ref.dtype)


@functools.partial(jax.jit, static_argnames=("eps", "inplace"))
def rmsnorm_pallas(x, weight, eps=DEFAULT_EPS, inplace=False):
    """x: [..., H], weight: [H] -> RMSNorm over the last axis.

    Output dtype is result_type(x.dtype, weight.dtype), matching HF's
    `weight * normed.to(input_dtype)` promotion.
    """
    orig_shape = x.shape
    H = orig_shape[-1]
    rows = 1
    for d in orig_shape[:-1]:
        rows *= d

    out_dtype = jnp.result_type(x.dtype, weight.dtype)

    x2d = x.reshape(rows, H)
    w2d = weight.reshape(1, H)

    in_itemsize = jnp.dtype(x.dtype).itemsize
    out_itemsize = jnp.dtype(out_dtype).itemsize

    vmem_cap = _vmem_capacity_bytes()
    # Budget for double-buffered in/out blocks + in-kernel f32 temporaries:
    # half of physical VMEM, capped at 64 MiB on the 128 MiB parts.
    vmem_budget = min(vmem_cap // 2, 64 * _MIB)
    tm = _choose_tm(rows, H, in_itemsize, out_itemsize, vmem_budget)

    # Scoped VMEM limit: comfortably above the budgeted requirement, with
    # headroom below physical capacity (48 MiB on v7x, 100 MiB on v5e/v6e).
    vmem_limit = max(32 * _MIB, min(vmem_cap - 16 * _MIB, 100 * _MIB))

    # No padding: Pallas masks the partial last block's reads/stores.
    grid = (_cdiv(rows, tm),)

    # Alias the input buffer to the output only when explicitly requested and
    # dtypes match; saves peak HBM residency when the producer's buffer is
    # donatable (typical in a real pipeline).
    aliases = {0: 0} if (inplace and out_dtype == x.dtype) else {}

    out2d = pl.pallas_call(
        functools.partial(_rmsnorm_kernel, eps=eps),
        out_shape=jax.ShapeDtypeStruct((rows, H), out_dtype),
        grid_spec=pltpu.PrefetchScalarGridSpec(
            num_scalar_prefetch=0,
            grid=grid,
            in_specs=[
                pl.BlockSpec((tm, H), lambda i: (i, 0)),
                pl.BlockSpec((1, H), lambda i: (0, 0)),  # weight: resident block
            ],
            out_specs=pl.BlockSpec((tm, H), lambda i: (i, 0)),
        ),
        compiler_params=pltpu.CompilerParams(
            dimension_semantics=("parallel",),   # megacore sharding on v7x
            vmem_limit_bytes=vmem_limit,
        ),
        input_output_aliases=aliases,
    )(x2d, w2d)

    return out2d.reshape(orig_shape)


def mixtral_rmsnorm_pipe_forward(inputs, weight, eps=DEFAULT_EPS):
    """Pallas equivalent of MixtralRMSNormPipe.forward.

    inputs = (hidden_states, attn_mask_placeholder, pos_placeholder,
              labels, *router_logits)
    returns (rmsnorm(hidden_states), labels, *router_logits)
    """
    hidden_states, _, _, labels, *router_logits = inputs
    # TODO(synk): loader_util.load_state_dict_into_module is host-side weight
    # loading; here `weight` is simply passed in.
    # Set inplace=True when hidden_states' buffer is donatable in the pipeline.
    return (rmsnorm_pallas(hidden_states, weight, eps=eps), labels, *router_logits)


def _reference_rmsnorm(x, weight, eps):
    x32 = x.astype(jnp.float32)
    var = jnp.mean(x32 * x32, axis=-1, keepdims=True)
    return weight * (x32 * jax.lax.rsqrt(var + eps)).astype(x.dtype)


if __name__ == "__main__":
    key = jax.random.PRNGKey(0)
    k_x, k_w, k_l, k_r, k_x2, k_x3 = jax.random.split(key, 6)

    batch, seq, hidden = 2, 8, 128
    eps = 1e-5  # typical Mixtral config.rms_norm_eps

    hidden_states = jax.random.normal(k_x, (batch, seq, hidden), dtype=jnp.float32)
    # MixtralRMSNorm weight is nn.Parameter(torch.ones(hidden)); perturb
    # deterministically so the multiply is non-trivial.
    weight = jnp.ones((hidden,), jnp.float32) + 0.01 * jax.random.normal(
        k_w, (hidden,), dtype=jnp.float32
    )
    labels = jax.random.randint(k_l, (batch, seq), 0, 100)
    router_logits = jax.random.normal(k_r, (batch * seq, 8), dtype=jnp.float32)

    inputs = (hidden_states, None, None, labels, router_logits)
    out = mixtral_rmsnorm_pipe_forward(inputs, weight, eps=eps)
    normed = jax.block_until_ready(out[0])

    ref = _reference_rmsnorm(hidden_states, weight, eps)
    assert normed.dtype == ref.dtype
    assert jnp.allclose(normed, ref, atol=1e-5, rtol=1e-5), "mismatch vs reference"
    assert out[1] is labels and out[2] is router_logits

    # Exercise the pad-free remainder path (rows not a multiple of the tile size
    # -> partial last grid block with masked stores).
    odd_x = jax.random.normal(k_x2, (3, 5, hidden), dtype=jnp.float32)
    odd_out = jax.block_until_ready(rmsnorm_pallas(odd_x, weight, eps=eps))
    odd_ref = _reference_rmsnorm(odd_x, weight, eps)
    assert jnp.allclose(odd_out, odd_ref, atol=1e-5, rtol=1e-5), "remainder mismatch"

    # Exercise HF-style dtype promotion: bf16 activations + f32 weight -> f32 out.
    bf_x = jax.random.normal(k_x3, (2, 8, hidden), dtype=jnp.bfloat16)
    bf_out = jax.block_until_ready(rmsnorm_pallas(bf_x, weight, eps=eps))
    bf_ref = _reference_rmsnorm(bf_x, weight, eps)
    assert bf_out.dtype == jnp.float32 and bf_ref.dtype == jnp.float32
    assert jnp.allclose(bf_out, bf_ref, atol=1e-2, rtol=1e-2), "bf16 mismatch"

    print("KERNEL_OK")
</pallas_src>

<mosaic_0001>
module attributes {stable_mosaic.version = 11 : i64} {
  func.func @_rmsnorm_kernel(%arg0: i32, %arg1: memref<8x128xf32, #tpu.memory_space<vmem>>, %arg2: memref<1x128xf32, #tpu.memory_space<vmem>>, %arg3: memref<8x128xf32, #tpu.memory_space<vmem>>) attributes {dimension_semantics = [#tpu.dimension_semantics<parallel>], iteration_bounds = array<i64: 2>, scalar_prefetch = 0 : i64, scratch_operands = 0 : i64, tpu.core_type = #tpu.core_type<tc>, window_params = [{transform_indices = @transform_0, window_bounds = array<i64: 8, 128>}, {pipeline_mode = #tpu.pipeline_mode<synchronous>, transform_indices = @transform_1, window_bounds = array<i64: 1, 128>}, {transform_indices = @transform_2, window_bounds = array<i64: 8, 128>}]} {
    %c0 = arith.constant 0 : index
    %c0_0 = arith.constant 0 : index
    %0 = vector.load %arg1[%c0, %c0_0] : memref<8x128xf32, #tpu.memory_space<vmem>>, vector<8x128xf32>
    %1 = arith.mulf %0, %0 : vector<8x128xf32>
    %cst = arith.constant dense<0.000000e+00> : vector<8xf32>
    %2 = vector.multi_reduction <add>, %1, %cst [1] : vector<8x128xf32> to vector<8xf32>
    %3 = vector.shape_cast %2 : vector<8xf32> to vector<8x1xf32>
    %cst_1 = arith.constant 1.280000e+02 : f32
    %4 = vector.broadcast %cst_1 : f32 to vector<8x1xf32>
    %5 = arith.divf %3, %4 : vector<8x1xf32>
    %cst_2 = arith.constant 9.99999974E-6 : f32
    %6 = vector.broadcast %cst_2 : f32 to vector<8x1xf32>
    %7 = arith.addf %5, %6 : vector<8x1xf32>
    %8 = math.rsqrt %7 : vector<8x1xf32>
    %9 = vector.broadcast %8 : vector<8x1xf32> to vector<8x128xf32>
    %10 = arith.mulf %0, %9 : vector<8x128xf32>
    %c0_3 = arith.constant 0 : index
    %c0_4 = arith.constant 0 : index
    %11 = vector.load %arg2[%c0_3, %c0_4] : memref<1x128xf32, #tpu.memory_space<vmem>>, vector<1x128xf32>
    %12 = vector.broadcast %11 : vector<1x128xf32> to vector<8x128xf32>
    %13 = arith.mulf %12, %10 : vector<8x128xf32>
    %c0_5 = arith.constant 0 : index
    %c0_6 = arith.constant 0 : index
    %14 = vector.load %arg3[%c0_5, %c0_6] : memref<8x128xf32, #tpu.memory_space<vmem>>, vector<8x128xf32>
    tpu.vector_store %arg3[%c0_5, %c0_6], %13 {strides = array<i32>} : memref<8x128xf32, #tpu.memory_space<vmem>>, vector<8x128xf32>,
    return
  }
  func.func @transform_0(%arg0: i32) -> (i32, i32) {
    %c0_i32 = arith.constant 0 : i32
    %c0_i32_0 = arith.constant 0 : i32
    return %arg0, %c0_i32 : i32, i32
  }
  func.func @transform_1(%arg0: i32) -> (i32, i32) {
    %c0_i32 = arith.constant 0 : i32
    %c0_i32_0 = arith.constant 0 : i32
    %c0_i32_1 = arith.constant 0 : i32
    return %c0_i32, %c0_i32_0 : i32, i32
  }
  func.func @transform_2(%arg0: i32) -> (i32, i32) {
    %c0_i32 = arith.constant 0 : i32
    %c0_i32_0 = arith.constant 0 : i32
    return %arg0, %c0_i32 : i32, i32
  }
}

</mosaic_0001>

<llo_original>
// kernel: rmsnorm_pallas.1
$region0: #{rmsnorm_pallas.1}
  #allocation0 [shape = 'u32[]', space=smem, size = 0x4, offset = 0x4, fixed_abs, tag = 'smem constant byte address 0x4 - core index']
  #allocation1 [shape = 'u32[72,128]{1,0:T(1,128)}', space=vmem, size = 0x9000, scoped, tag = 'internal scratch']
  %s0 = inlined_call_operand.hbm [shape: f32[16,128], index: 0, kind: input, shape index: {}]
  %s1 = inlined_call_operand.vmem [shape: f32[1,128], index: 1, kind: input, shape index: {}]
  %s2 = inlined_call_operand.hbm [shape: f32[16,128], index: 2, kind: output, shape index: {}]
  %s3 = sld [smem:[#allocation0]]
  $region45: #{rmsnorm_pallas.1} parent=0
    _
  %s5 = ssub.s32 1, %s3
  %s6 = scalar_select 0, %s5, %s3
  $region1: #{rmsnorm_pallas.1} parent=0
    #allocation2 [shape = 'u8[8192]{0}', space=vmem, size = 0x2000, scoped, tag = 'input window, operand 0']
    #allocation3 [shape = 's32[2]{0}', space=sflag, size = 0x8, scoped, tag = 'scoped memory for rmsnorm_pallas.1']
    #allocation4 [shape = 's32[2]{0}', space=sflag, size = 0x8, scoped, tag = 'scoped memory for rmsnorm_pallas.1']
    #allocation5 [shape = 'u8[8192]{0}', space=vmem, size = 0x2000, scoped, tag = 'output window, operand 0']
    %7 = vsyncpa [#allocation3], 0
    %s8 = scalar_lea.sflag [#allocation3], 1
    %9 = vsyncpa %s8, 0
    %10 = vsyncpa [#allocation4], 0
    %s11 = scalar_lea.sflag [#allocation4], 1
    %12 = vsyncpa %s11, 0
    loop: start=0, step=1, limit=4
    $region2: #{rmsnorm_pallas.1} parent=1 // loop_pre_header
      _
    $region3: #{rmsnorm_pallas.1} parent=1 // loop_header
      %s14 = sphi 0, %s18
      %p15 = scmp.ge.s32.totalorder %s14, 4
      %s24 = sphi 0, %s26
      %s27 = sphi 0, %s24
      %s28 = sphi 0, %s27
      %s44 = sphi 0, %s28
      %s48 = sphi 0, %s48
      %s50 = sphi 0, %s48
      %s51 = sphi 0, %s50
      %s65 = sphi 0, %s51
      %s71 = sphi 0, %s73
      %s74 = sphi 0, %s71
      %s75 = sphi 0, %s74
      %s91 = sphi 0, %s75
    $region4: #{rmsnorm_pallas.1} parent=1 // loop_header_branch
      %17 = sbr.rel (%p15) target = $region8
    $region5: #{rmsnorm_pallas.1} parent=1 // loop_body
      %s19 = ssub.s32 %s14, 1
      %s20 = ssub.s32 %s14, 2
      %s21 = sadd.s32 %s14, 1
      %s22 = ssub.s32 %s14, %s21
      %p23 = scmp.eq.s32.totalorder %s22, 0
      %s25 = sadd.s32 %s24, 1
      %s26 = scalar_select %p23, %s24, %s25
      %p29 = pneg %p23
      %p30 = scmp.eq.s32.totalorder %s14, 1
      %p31 = por %p29, %p30
      %p32 = scmp.ne.s32.totalorder %s24, %s27
      %p33 = scmp.eq.s32.totalorder %s14, 0
      %p34 = por %p32, %p33
      %p35 = scmp.ne.s32.totalorder %s24, %s27
      %p36 = scmp.eq.s32.totalorder %s19, 1
      %p37 = por %p35, %p36
      %p38 = scmp.ne.s32.totalorder %s27, %s28
      %p39 = scmp.eq.s32.totalorder %s19, 0
      %p40 = por %p38, %p39
      %p41 = scmp.ne.s32.totalorder %s27, %s28
      %p42 = scmp.eq.s32.totalorder %s20, 1
      %p43 = por %p41, %p42
      %p45 = scmp.ne.s32.totalorder %s28, %s44
      %p46 = scmp.eq.s32.totalorder %s20, 0
      %p47 = por %p45, %p46
      %s49 = sadd.s32 %s48, 1
      %p52 = scmp.eq.s32.totalorder %s14, 1
      %p53 = scmp.ne.s32.totalorder %s48, %s50
      %p54 = scmp.eq.s32.totalorder %s14, 0
      %p55 = por %p53, %p54
      %p56 = scmp.ne.s32.totalorder %s48, %s50
      %p57 = scmp.eq.s32.totalorder %s19, 1
      %p58 = por %p56, %p57
      %p59 = scmp.ne.s32.totalorder %s50, %s51
      %p60 = scmp.eq.s32.totalorder %s19, 0
      %p61 = por %p59, %p60
      %p62 = scmp.ne.s32.totalorder %s50, %s51
      %p63 = scmp.eq.s32.totalorder %s20, 1
      %p64 = por %p62, %p63
      %p66 = scmp.ne.s32.totalorder %s51, %s65
      %p67 = scmp.eq.s32.totalorder %s20, 0
      %p68 = por %p66, %p67
      %s69 = ssub.s32 %s14, %s21
      %p70 = scmp.eq.s32.totalorder %s69, 0
      %s72 = sadd.s32 %s71, 1
      %s73 = scalar_select %p70, %s71, %s72
      %p76 = pneg %p70
      %p77 = scmp.eq.s32.totalorder %s14, 1
      %p78 = por %p76, %p77
      %p79 = scmp.ne.s32.totalorder %s71, %s74
      %p80 = scmp.eq.s32.totalorder %s14, 0
      %p81 = por %p79, %p80
      %p82 = scmp.ne.s32.totalorder %s71, %s74
      %p83 = scmp.eq.s32.totalorder %s19, 1
      %p84 = por %p82, %p83
      %p85 = scmp.ne.s32.totalorder %s74, %s75
      %p86 = scmp.eq.s32.totalorder %s19, 0
      %p87 = por %p85, %p86
      %p88 = scmp.ne.s32.totalorder %s74, %s75
      %p89 = scmp.eq.s32.totalorder %s20, 1
      %p90 = por %p88, %p89
      %p92 = scmp.ne.s32.totalorder %s75, %s91
      %p93 = scmp.eq.s32.totalorder %s20, 0
      %p94 = por %p92, %p93
      %p95 = scmp.le.s32.totalorder 1, %s14
      %p96 = scmp.lt.s32.totalorder %s14, 3
      %p97 = pnand %p95, %p96
      %p98 = pneg %p97
      // Predicated region
      $region9: #{rmsnorm_pallas.1} parent=5 // pred_check
        _
      $region10: #{rmsnorm_pallas.1} parent=5 // pred_check_branch
        %100 = sbr.rel (%p97) target = $region12
      $region11: #{rmsnorm_pallas.1} parent=5 // pred_region
        %s101 = ssub.s32 %s14, 1
        // Predicated region
        $region13: #{rmsnorm_pallas.1} parent=11 // pred_check
          %p102 = pneg %p61
        $region14: #{rmsnorm_pallas.1} parent=11 // pred_check_branch
          %104 = sbr.rel (%p102) target = $region16
        $region15: #{rmsnorm_pallas.1} parent=11 // pred_region
          _
        $region16: #{rmsnorm_pallas.1} parent=11 // pred_fallthru
          _
      $region12: #{rmsnorm_pallas.1} parent=5 // pred_fallthru
        _
      %p105 = scmp.lt.s32.totalorder %s14, 2
      // Predicated region
      $region17: #{rmsnorm_pallas.1} parent=5 // pred_check
        %p106 = pneg %p105
      $region18: #{rmsnorm_pallas.1} parent=5 // pred_check_branch
        %108 = sbr.rel (%p106) target = $region20
      $region19: #{rmsnorm_pallas.1} parent=5 // pred_region
        // Predicated region
        $region21: #{rmsnorm_pallas.1} parent=19 // pred_check
          %p109 = pneg %p34
        $region22: #{rmsnorm_pallas.1} parent=19 // pred_check_branch
          %111 = sbr.rel (%p109) target = $region24
        $region23: #{rmsnorm_pallas.1} parent=19 // pred_region
          %s112 = sand.u32 %s24, 1
          %s113 = scalar_lea.sflag [#allocation3], %s112
          %s114 = sand.u32 %s24, 1
          %s115 = smul.addr %s114, 8
          %s116 = scalar_lea.vmem [#allocation2], %s115
          %118 = vsyncadd %s113, 0
          %s119 = smul.addr %s14, 8
          %s120 = scalar_lea.hbm %s0, %s119
          %s122 = sshll.u32 %s120, 4
          %s123 = int_to_ptr.hbm [resolvable:$true] %s122
          %s124 = sshll.u32 %s116, 4
          %s125 = int_to_ptr.vmem [resolvable:$true] %s124
          %127 = dma.hbm_to_vmem [thread:$0]  %s123, 128, %s125, %s113
        $region24: #{rmsnorm_pallas.1} parent=19 // pred_fallthru
          _
      $region20: #{rmsnorm_pallas.1} parent=5 // pred_fallthru
        _
      %p128 = scmp.le.s32.totalorder 1, %s14
      %p129 = scmp.lt.s32.totalorder %s14, 3
      %p130 = pnand %p128, %p129
      %p131 = pneg %p130
      // Predicated region
      $region25: #{rmsnorm_pallas.1} parent=5 // pred_check
        _
      $region26: #{rmsnorm_pallas.1} parent=5 // pred_check_branch
        %133 = sbr.rel (%p130) target = $region28
      $region27: #{rmsnorm_pallas.1} parent=5 // pred_region
        %s134 = ssub.s32 %s14, 1
        %s135 = sand.u32 %s27, 1
        %s136 = scalar_lea.sflag [#allocation3], %s135
        %s137 = sand.u32 %s27, 1
        %s138 = smul.addr %s137, 8
        %s139 = scalar_lea.vmem [#allocation2], %s138
        // Predicated region
        $region29: #{rmsnorm_pallas.1} parent=27 // pred_check
          %p140 = pneg %p40
        $region30: #{rmsnorm_pallas.1} parent=27 // pred_check_branch
          %142 = sbr.rel (%p140) target = $region32
        $region31: #{rmsnorm_pallas.1} parent=27 // pred_region
          %144 = dma.done %s136, 128
        $region32: #{rmsnorm_pallas.1} parent=27 // pred_fallthru
          _
        %s145 = sand.u32 %s27, 1
        %s146 = scalar_lea.sflag [#allocation3], %s145
        %s147 = sand.u32 %s27, 1
        %s148 = smul.addr %s147, 8
        %s149 = scalar_lea.vmem [#allocation2], %s148
        %p150 = pneg %p40
        %p151 = pneg %p37
        %p152 = pneg %p61
        %p153 = pneg %p58
        %p154 = pneg %p87
        %p155 = pneg %p84
        %s156 = sand.u32 %s74, 1
        %s157 = scalar_lea.sflag [#allocation4], %s156
        %s158 = sand.u32 %s74, 1
        %s159 = smul.addr %s158, 8
        %s160 = scalar_lea.vmem [#allocation5], %s159
        %v161 = vld [vmem:[%s139] sm:$0xff]
        %v162 = vmul.f32 %v161, %v161
        %163 = vadd.xlane.f32.xlu0 %v162
        %v164 = vpop.xlane.xlu0 %163
        %v165 = vrcp.pop 128.0
        %v166 = vmul.f32 128.0, %v165
        %v167 = vsub.f32 1.0, %v166
        %v168 = vmul.f32 %v165, %v167
        %v169 = vadd.f32 %v165, %v168
        %vm170 = vweird.f32 %v165
        %v171 = vsel %vm170, %v165, %v169
        %v172 = vmul.f32 %v164, %v171
        %v173 = vadd.f32 %v172, 1e-05
        %v174 = vrsqrt.pop %v173
        %v175 = vmul.f32 %v174, %v173
        %v176 = vmul.f32 %v175, %v174
        %v177 = vmul.f32 0.5, %v176
        %v178 = vsub.f32 1.5, %v177
        %v179 = vmul.f32 %v174, %v178
        %vm180 = vweird.f32 %v173
        %vm181 = vweird.f32 %v174
        %vm182 = vmor %vm180, %vm181
        %v183 = vsel %vm182, %v174, %v179
        %v184 = vmul.f32 %v161, %v183
        %v185 = vld [vmem:[%s1] sm:$0x1]
        %v187 = vperm.slane %v185, 0
        %v189 = vmul.f32 %v187, %v184
        %190 = vst [vmem:[%s160] sm:$0xff] %v189
        %s191 = sand.u32 %s74, 1
        %s192 = scalar_lea.sflag [#allocation4], %s191
        %s193 = sand.u32 %s74, 1
        %s194 = smul.addr %s193, 8
        %s195 = scalar_lea.vmem [#allocation5], %s194
        // Predicated region
        $region33: #{rmsnorm_pallas.1} parent=27 // pred_check
          %p196 = pneg %p84
        $region34: #{rmsnorm_pallas.1} parent=27 // pred_check_branch
          %198 = sbr.rel (%p196) target = $region36
        $region35: #{rmsnorm_pallas.1} parent=27 // pred_region
          %200 = vsyncadd %s192, 0
          %s201 = smul.addr %s19, 8
          %s202 = scalar_lea.hbm %s2, %s201
          %s204 = sshll.u32 %s195, 4
          %s205 = int_to_ptr.vmem [resolvable:$true] %s204
          %s206 = sshll.u32 %s202, 4
          %s207 = int_to_ptr.hbm [resolvable:$true] %s206
          %209 = dma.vmem_to_hbm [thread:$0]  %s205, 128, %s207, %s192
        $region36: #{rmsnorm_pallas.1} parent=27 // pred_fallthru
          _
      $region28: #{rmsnorm_pallas.1} parent=5 // pred_fallthru
        _
      %p210 = scmp.le.s32.totalorder 2, %s14
      // Predicated region
      $region37: #{rmsnorm_pallas.1} parent=5 // pred_check
        %p211 = pneg %p210
      $region38: #{rmsnorm_pallas.1} parent=5 // pred_check_branch
        %213 = sbr.rel (%p211) target = $region40
      $region39: #{rmsnorm_pallas.1} parent=5 // pred_region
        %s214 = ssub.s32 %s14, 2
        // Predicated region
        $region41: #{rmsnorm_pallas.1} parent=39 // pred_check
          %p215 = pneg %p90
        $region42: #{rmsnorm_pallas.1} parent=39 // pred_check_branch
          %217 = sbr.rel (%p215) target = $region44
        $region43: #{rmsnorm_pallas.1} parent=39 // pred_region
          %s218 = sand.u32 %s75, 1
          %s219 = scalar_lea.sflag [#allocation4], %s218
          %s220 = sand.u32 %s75, 1
          %s221 = smul.addr %s220, 8
          %s222 = scalar_lea.vmem [#allocation5], %s221
          %224 = dma.done %s219, 128
        $region44: #{rmsnorm_pallas.1} parent=39 // pred_fallthru
          _
      $region40: #{rmsnorm_pallas.1} parent=5 // pred_fallthru
        _
    $region6: #{rmsnorm_pallas.1} parent=1 // loop_footer
      %s18 = sadd.s32 1, %s14
    $region7: #{rmsnorm_pallas.1} parent=1 // loop_footer_branch
      %13 = sbr.rel target = $region3
    $region8: #{rmsnorm_pallas.1} parent=1 // loop_exit
      _
    %225 = vsyncpa [#allocation3], 1
    %s226 = scalar_lea.sflag [#allocation3], 1
    %227 = vsyncpa %s226, 1
    %228 = vsyncpa [#allocation4], 1
    %s229 = scalar_lea.sflag [#allocation4], 1
    %230 = vsyncpa %s229, 1

</llo_original>
